<compile_context>
chip_gen: v6e
topology: v6e:2x2x1
jax: 0.10.0
libtpu: 0.0.40
codegen_flags: <defaults>
</compile_context>

<pallas_src>
import functools

import jax
import jax.numpy as jnp
from jax.experimental import pallas as pl
from jax.experimental.pallas import tpu as pltpu


def _round_up(v, m):
    return ((v + m - 1) // m) * m


def _sublane_pack(dtype):
    # 4-byte -> 8, 2-byte -> 16, 1-byte -> 32 (sub-32-bit packs along sublanes).
    itemsize = jnp.dtype(dtype).itemsize
    return 8 * max(1, 4 // itemsize)


def _ce_ls_kernel(x_ref, t_ref, out_ref, *, ls, n_dim, tb, total_rows):
    """One grid step: (tb, N) logits tile -> one per-tile partial loss sum."""
    i = pl.program_id(0)

    x = x_ref[...].astype(jnp.float32)               # (tb, N)
    t = t_ref[...]                                   # (tb, 1) int32, streamed

    # Numerically stable logsumexp along the lane (class) axis.
    m = jnp.max(x, axis=-1, keepdims=True)           # (tb, 1)
    lse = jnp.log(jnp.sum(jnp.exp(x - m), axis=-1, keepdims=True)) + m

    # Fused weighted reduction:
    #   -sum(logprobs * (ls*onehot + (1-ls)/N)) = lse - sum(x * w),
    #   w = (1-ls)/N + ls*onehot
    smooth = (1.0 - ls) / n_dim
    classes = jax.lax.broadcasted_iota(jnp.int32, x.shape, 1)
    w = jnp.where(classes == t, ls + smooth, smooth)
    loss = lse - jnp.sum(x * w, axis=-1, keepdims=True)       # (tb, 1)

    # Mask ragged-tail rows.  The overhanging rows hold undefined data, so this
    # must stay a select (jnp.where), never a multiply.
    row = i * tb + jax.lax.broadcasted_iota(jnp.int32, (tb, 1), 0)
    loss = jnp.where(row < total_rows, loss, 0.0)

    # Per-tile partial sum, written lane-dense (single store per grid step).
    tile_sum = jnp.sum(loss, axis=0, keepdims=True)            # (1, 1)
    out_ref[...] = jnp.broadcast_to(tile_sum, out_ref.shape)   # (1, 128)


def cross_entropy_label_smoothing(
    x,
    target,
    *,
    ls=0.9,
    tb=None,
    vmem_budget_bytes=24 * 1024 * 1024,
    vmem_limit_bytes=48 * 1024 * 1024,
):
    """x: (B, N) float logits, target: (B,) int labels -> scalar f32 loss."""
    B, N = x.shape
    itemsize = jnp.dtype(x.dtype).itemsize
    pack = _sublane_pack(x.dtype)

    if tb is None:
        # Per-row working-set estimate: double-buffered streamed logits block,
        # the f32 tile temp (+ one fused-temp margin), and the double-buffered
        # lane-padded (tb, 1) int32 target block.
        per_row = 2 * N * itemsize + 2 * N * 4 + 2 * 128 * 4
        tb = max(pack, vmem_budget_bytes // per_row)
        # Keep >= ~8 grid steps when B allows it (v7x: 2 TCs + pipeline depth).
        min_tiles = 8
        if B >= min_tiles * pack:
            tb = min(tb, _round_up(-(-B // min_tiles), pack))
    tb = min(tb, _round_up(B, pack))
    tb = max(pack, (tb // pack) * pack)

    num_tiles = pl.cdiv(B, tb)
    b_pad = num_tiles * tb

    t2d = target.astype(jnp.int32).reshape(B, 1)
    if b_pad > B:
        t2d = jnp.pad(t2d, ((0, b_pad - B), (0, 0)))

    kernel = functools.partial(
        _ce_ls_kernel, ls=float(ls), n_dim=N, tb=tb, total_rows=B
    )

    per_tile = pl.pallas_call(
        kernel,
        out_shape=jax.ShapeDtypeStruct((num_tiles, 128), jnp.float32),
        grid_spec=pltpu.PrefetchScalarGridSpec(
            num_scalar_prefetch=0,
            grid=(num_tiles,),
            in_specs=[
                # Streamed logits tile (last block may overhang B; rows masked).
                pl.BlockSpec((tb, N), lambda i: (i, 0)),
                # Streamed targets tile (tiny DMA, hidden behind the logits DMA).
                pl.BlockSpec((tb, 1), lambda i: (i, 0)),
            ],
            out_specs=pl.BlockSpec((1, 128), lambda i: (i, 0)),
        ),
        compiler_params=pltpu.CompilerParams(
            dimension_semantics=("parallel",),
            vmem_limit_bytes=vmem_limit_bytes,
        ),
    )(x, t2d)

    # Tiny final reduction over num_tiles partials in plain JAX.
    return jnp.sum(per_tile[:, 0]) / B


def _reference(x, target, ls, n_dim):
    # Pure-JAX reference mirroring the PyTorch module.
    tgt = jax.nn.one_hot(target, n_dim, dtype=jnp.float32)
    tgt = tgt * ls + (1.0 - ls) / n_dim
    logprobs = jax.nn.log_softmax(x.astype(jnp.float32), axis=-1)
    loss = -(logprobs * tgt).sum(-1)
    return loss.mean()


if __name__ == "__main__":
    ls = 0.9
    key = jax.random.PRNGKey(0)
    kx, kt = jax.random.split(key)

    # Small single-tile f32 case.
    B, N = 16, 128
    x = jax.random.normal(kx, (B, N), dtype=jnp.float32)
    target = jax.random.randint(kt, (B,), 0, N, dtype=jnp.int32)
    loss = jax.block_until_ready(cross_entropy_label_smoothing(x, target, ls=ls))
    ref = _reference(x, target, ls, N)
    assert jnp.allclose(loss, ref, atol=1e-5, rtol=1e-5), (loss, ref)

    # Ragged multi-tile f32 case (B % tb != 0).
    B2, N2 = 20, 256
    x2 = jax.random.normal(kx, (B2, N2), dtype=jnp.float32)
    t2 = jax.random.randint(kt, (B2,), 0, N2, dtype=jnp.int32)
    loss2 = jax.block_until_ready(
        cross_entropy_label_smoothing(x2, t2, ls=ls, tb=8)
    )
    ref2 = _reference(x2, t2, ls, N2)
    assert jnp.allclose(loss2, ref2, atol=1e-5, rtol=1e-5), (loss2, ref2)

    # bf16 ragged multi-tile case (16-row sublane packing).
    B3, N3 = 40, 256
    x3 = jax.random.normal(kx, (B3, N3), dtype=jnp.float32).astype(jnp.bfloat16)
    t3 = jax.random.randint(kt, (B3,), 0, N3, dtype=jnp.int32)
    loss3 = jax.block_until_ready(
        cross_entropy_label_smoothing(x3, t3, ls=ls, tb=16)
    )
    ref3 = _reference(x3, t3, ls, N3)
    assert jnp.allclose(loss3, ref3, atol=1e-4, rtol=1e-4), (loss3, ref3)

    print("KERNEL_OK")
</pallas_src>

<mosaic_0001>
module attributes {stable_mosaic.version = 11 : i64} {
  func.func @_ce_ls_kernel(%arg0: i32, %arg1: memref<16x128xf32, #tpu.memory_space<vmem>>, %arg2: memref<16x1xi32, #tpu.memory_space<vmem>>, %arg3: memref<1x128xf32, #tpu.memory_space<vmem>>) attributes {dimension_semantics = [#tpu.dimension_semantics<parallel>], iteration_bounds = array<i64: 1>, scalar_prefetch = 0 : i64, scratch_operands = 0 : i64, tpu.core_type = #tpu.core_type<tc>, window_params = [{transform_indices = @transform_0, window_bounds = array<i64: 16, 128>}, {transform_indices = @transform_1, window_bounds = array<i64: 16, 1>}, {transform_indices = @transform_2, window_bounds = array<i64: 1, 128>}]} {
    %c0 = arith.constant 0 : index
    %c0_0 = arith.constant 0 : index
    %0 = vector.load %arg1[%c0, %c0_0] : memref<16x128xf32, #tpu.memory_space<vmem>>, vector<16x128xf32>
    %c0_1 = arith.constant 0 : index
    %c0_2 = arith.constant 0 : index
    %1 = vector.load %arg2[%c0_1, %c0_2] : memref<16x1xi32, #tpu.memory_space<vmem>>, vector<16x1xi32>
    %cst = arith.constant dense<0xFF800000> : vector<16xf32>
    %2 = vector.multi_reduction <maximumf>, %0, %cst [1] : vector<16x128xf32> to vector<16xf32>
    %3 = vector.shape_cast %2 : vector<16xf32> to vector<16x1xf32>
    %4 = vector.broadcast %3 : vector<16x1xf32> to vector<16x128xf32>
    %5 = arith.subf %0, %4 : vector<16x128xf32>
    %6 = math.exp %5 : vector<16x128xf32>
    %cst_3 = arith.constant dense<0.000000e+00> : vector<16xf32>
    %7 = vector.multi_reduction <add>, %6, %cst_3 [1] : vector<16x128xf32> to vector<16xf32>
    %8 = vector.shape_cast %7 : vector<16xf32> to vector<16x1xf32>
    %9 = math.log %8 : vector<16x1xf32>
    %10 = arith.addf %9, %3 : vector<16x1xf32>
    %11 = tpu.iota {dimensions = array<i32: 1>} : vector<16x128xi32>
    %12 = vector.broadcast %1 : vector<16x1xi32> to vector<16x128xi32>
    %13 = arith.cmpi eq, %11, %12 : vector<16x128xi32>
    %cst_4 = arith.constant 0.900781273 : f32
    %cst_5 = arith.constant 7.812500e-04 : f32
    %14 = vector.broadcast %cst_4 : f32 to vector<16x128xf32>
    %15 = vector.broadcast %cst_5 : f32 to vector<16x128xf32>
    %16 = arith.select %13, %14, %15 : vector<16x128xi1>, vector<16x128xf32>
    %17 = arith.mulf %0, %16 : vector<16x128xf32>
    %cst_6 = arith.constant dense<0.000000e+00> : vector<16xf32>
    %18 = vector.multi_reduction <add>, %17, %cst_6 [1] : vector<16x128xf32> to vector<16xf32>
    %19 = vector.shape_cast %18 : vector<16xf32> to vector<16x1xf32>
    %20 = arith.subf %10, %19 : vector<16x1xf32>
    %c16_i32 = arith.constant 16 : i32
    %21 = arith.muli %arg0, %c16_i32 : i32
    %22 = tpu.iota {dimensions = array<i32: 0>} : vector<16x1xi32>
    %23 = vector.broadcast %21 : i32 to vector<16x1xi32>
    %24 = arith.addi %23, %22 : vector<16x1xi32>
    %c16_i32_7 = arith.constant 16 : i32
    %25 = vector.broadcast %c16_i32_7 : i32 to vector<16x1xi32>
    %26 = arith.cmpi slt, %24, %25 : vector<16x1xi32>
    %cst_8 = arith.constant 0.000000e+00 : f32
    %27 = vector.broadcast %cst_8 : f32 to vector<16x1xf32>
    %28 = arith.select %26, %20, %27 : vector<16x1xi1>, vector<16x1xf32>
    %cst_9 = arith.constant dense<0.000000e+00> : vector<1xf32>
    %29 = vector.multi_reduction <add>, %28, %cst_9 [0] : vector<16x1xf32> to vector<1xf32>
    %30 = vector.shape_cast %29 : vector<1xf32> to vector<1x1xf32>
    %31 = vector.shape_cast %30 : vector<1x1xf32> to vector<1x1xf32>
    %32 = vector.broadcast %31 : vector<1x1xf32> to vector<1x128xf32>
    %c0_10 = arith.constant 0 : index
    %c0_11 = arith.constant 0 : index
    %33 = vector.load %arg3[%c0_10, %c0_11] : memref<1x128xf32, #tpu.memory_space<vmem>>, vector<1x128xf32>
    tpu.vector_store %arg3[%c0_10, %c0_11], %32 {strides = array<i32>} : memref<1x128xf32, #tpu.memory_space<vmem>>, vector<1x128xf32>,
    return
  }
  func.func @transform_0(%arg0: i32) -> (i32, i32) {
    %c0_i32 = arith.constant 0 : i32
    %c0_i32_0 = arith.constant 0 : i32
    return %arg0, %c0_i32 : i32, i32
  }
  func.func @transform_1(%arg0: i32) -> (i32, i32) {
    %c0_i32 = arith.constant 0 : i32
    %c0_i32_0 = arith.constant 0 : i32
    return %arg0, %c0_i32 : i32, i32
  }
  func.func @transform_2(%arg0: i32) -> (i32, i32) {
    %c0_i32 = arith.constant 0 : i32
    %c0_i32_0 = arith.constant 0 : i32
    return %arg0, %c0_i32 : i32, i32
  }
}

</mosaic_0001>

<llo_original>
// kernel: tpu_custom_call.1
$region0: #{tpu_custom_call.1}
  #allocation0 [shape = 'u32[]', space=smem, size = 0x4, offset = 0x4, fixed_abs, tag = 'smem constant byte address 0x4 - core index']
  #allocation1 [shape = 'u32[144,128]{1,0:T(1,128)}', space=vmem, size = 0x12000, scoped, tag = 'internal scratch']
  %s0 = inlined_call_operand.vmem [shape: f32[16,128], index: 0, kind: input, shape index: {}]
  %s1 = inlined_call_operand.vmem [shape: s32[16,1], index: 1, kind: input, shape index: {}]
  %s2 = inlined_call_operand.hbm [shape: f32[1,128], index: 2, kind: output, shape index: {}]
  %s3 = sld [smem:[#allocation0]]
  $region18: #{tpu_custom_call.1} parent=0
    _
  %s5 = ssub.s32 1, %s3
  %s6 = scalar_select 0, %s5, %s3
  $region1: #{tpu_custom_call.1} parent=0
    #allocation2 [shape = 'u8[512]{0}', space=vmem, size = 0x400, scoped, tag = 'output window, operand 0, single buffered']
    #allocation3 [shape = 's32[1]{0}', space=sflag, size = 0x4, scoped, tag = 'scoped memory for tpu_custom_call.1']
    %7 = vsyncpa [#allocation3], 0
    // Predicated region
    $region2: #{tpu_custom_call.1} parent=1 // pred_check
      _
    $region3: #{tpu_custom_call.1} parent=1 // pred_check_branch
      %9 = sbr.rel (0) target = $region5
    $region4: #{tpu_custom_call.1} parent=1 // pred_region
      _
    $region5: #{tpu_custom_call.1} parent=1 // pred_fallthru
      _
    // Predicated region
    $region6: #{tpu_custom_call.1} parent=1 // pred_check
      _
    $region7: #{tpu_custom_call.1} parent=1 // pred_check_branch
      %11 = sbr.rel (0) target = $region9
    $region8: #{tpu_custom_call.1} parent=1 // pred_region
      _
    $region9: #{tpu_custom_call.1} parent=1 // pred_fallthru
      _
    %v12 = vld [vmem:[%s0] sm:$0xff]
    %v13 = vld [vmem:[%s0 + $0x8] sm:$0xff]
    %v14 = vld [vmem:[%s1] sm:$0xff]
    %v15 = vld [vmem:[%s1 + $0x8] sm:$0xff]
    %16 = vmax.xlane.f32.xlu0 %v12
    %v17 = vpop.xlane.xlu0 %16
    %18 = vmax.xlane.f32.xlu0 %v13
    %v19 = vpop.xlane.xlu0 %18
    %v20 = vsub.f32 %v12, %v17
    %v21 = vsub.f32 %v13, %v19
    %v22 = vmul.f32 %v20, 1.442695
    %v23 = vpow.pop %v22
    %v24 = vmul.f32 %v21, 1.442695
    %v25 = vpow.pop %v24
    %26 = vadd.xlane.f32.xlu0 %v23
    %v27 = vpop.xlane.xlu0 %26
    %28 = vadd.xlane.f32.xlu0 %v25
    %v29 = vpop.xlane.xlu0 %28
    %v30 = vlog2.pop %v27
    %v31 = vmul.f32 %v30, 0.6931472
    %v32 = vlog2.pop %v29
    %v33 = vmul.f32 %v32, 0.6931472
    %v34 = vadd.f32 %v31, %v17
    %v35 = vadd.f32 %v33, %v19
    %v36 = vlaneseq
    %v37 = vand.u32 %v36, 127
    %38 = vset.pattern.permute.xlu0 0
    %39 = vperm.xlu0 %38, %v14
    %v40 = vpop.permute.xlu0 %39
    %41 = vset.pattern.permute.xlu0 0
    %42 = vperm.xlu0 %41, %v15
    %v43 = vpop.permute.xlu0 %42
    %vm44 = vcmp.eq.s32.totalorder %v37, %v40
    %vm45 = vcmp.eq.s32.totalorder %v37, %v43
    %v46 = vsel %vm44, 0.9007813, 0.00078125
    %v47 = vsel %vm45, 0.9007813, 0.00078125
    %v48 = vmul.f32 %v12, %v46
    %v49 = vmul.f32 %v13, %v47
    %50 = vadd.xlane.f32.xlu0 %v48
    %v51 = vpop.xlane.xlu0 %50
    %52 = vadd.xlane.f32.xlu0 %v49
    %v53 = vpop.xlane.xlu0 %52
    %v54 = vsub.f32 %v34, %v51
    %v55 = vsub.f32 %v35, %v53
    %s56 = smul.u32 0, 16
    %v57 = vlaneseq
    %v58 = vshrl.u32 %v57, 7
    %v59 = vadd.s32 %v58, 8
    %v60 = vstv %s56
    %v61 = vadd.s32 %v60, %v58
    %v62 = vadd.s32 %v60, %v59
    %vm63 = vcmp.lt.s32.totalorder %v61, 16
    %vm64 = vcmp.lt.s32.totalorder %v62, 16
    %v65 = vsel %vm63, %v54, 0.0
    %v66 = vsel %vm64, %v55, 0.0
    %v67 = vadd.f32 %v65, %v66
    %v68 = vrot.slane %v67, 4
    %v69 = vadd.f32 %v67, %v68
    %v70 = vrot.slane %v69, 2
    %v71 = vadd.f32 %v69, %v70
    %v72 = vrot.slane %v71, 1
    %v73 = vadd.f32 %v71, %v72
    %74 = vst [vmem:[#allocation2] sm:$0x1] %v73
    // Predicated region
    $region10: #{tpu_custom_call.1} parent=1 // pred_check
      _
    $region11: #{tpu_custom_call.1} parent=1 // pred_check_branch
      %76 = sbr.rel (0) target = $region13
    $region12: #{tpu_custom_call.1} parent=1 // pred_region
      %s78 = ssub.s32 16, 16
      %79 = vsyncadd [#allocation3], %s78
      %s81 = sshll.u32 [#allocation2], 4
      %s82 = int_to_ptr.vmem [resolvable:$true] %s81
      %84 = dma.vmem_to_hbm [thread:$0]  %s82, 16, %s2, [#allocation3]
    $region13: #{tpu_custom_call.1} parent=1 // pred_fallthru
      _
    // Predicated region
    $region14: #{tpu_custom_call.1} parent=1 // pred_check
      _
    $region15: #{tpu_custom_call.1} parent=1 // pred_check_branch
      %86 = sbr.rel (0) target = $region17
    $region16: #{tpu_custom_call.1} parent=1 // pred_region
      %87 = dma.done [#allocation3], 16
    $region17: #{tpu_custom_call.1} parent=1 // pred_fallthru
      _
    %88 = vsyncpa [#allocation3], 1

</llo_original>
